<compile_context>
chip_gen: v5e
topology: v5e:2x2
jax: 0.10.0
libtpu: 0.0.40
codegen_flags: <defaults>
</compile_context>

<pallas_src>
import jax
import jax.numpy as jnp
from jax.experimental import pallas as pl
from jax.experimental.pallas import tpu as pltpu

BN_EPS = 1e-5


# ----------------------------------------------------------------------------
# Pass 1: per-channel sum and sum-of-squares (streaming over N and HW tiles).
# ----------------------------------------------------------------------------
def bn_stats_kernel(x_ref, sum_ref, sq_ref):
    # x_ref:   (1, Cin, THW) tile of activations
    # sum_ref: (Cin, 1) resident accumulator (same block for every grid step)
    # sq_ref:  (Cin, 1) resident accumulator
    @pl.when((pl.program_id(0) == 0) & (pl.program_id(1) == 0))
    def _():
        sum_ref[...] = jnp.zeros_like(sum_ref)
        sq_ref[...] = jnp.zeros_like(sq_ref)

    x = x_ref[0]  # (Cin, THW), f32
    sum_ref[...] += jnp.sum(x, axis=1, keepdims=True)
    sq_ref[...] += jnp.sum(x * x, axis=1, keepdims=True)


# ----------------------------------------------------------------------------
# Pass 2: folded BN+conv as a streaming matmul with lane-dense output.
# ----------------------------------------------------------------------------
def folded_conv1x1_kernel(x_ref, w_ref, b_ref, o_ref):
    # x_ref: (1, Cin, THW)   activation tile
    # w_ref: (Cout_pad, Cin) BN-folded conv weight (resident, loaded once)
    # b_ref: (Cout_pad, 1)   BN-folded conv bias   (resident, loaded once)
    # o_ref: (1, Cout_pad, THW)
    x = x_ref[0]                                    # (Cin, THW)
    w = w_ref[...]                                  # (Cout_pad, Cin)
    o_ref[0] = (
        jnp.dot(w, x, preferred_element_type=jnp.float32) + b_ref[...]
    )


def _pick_spatial_tile(hw):
    # Largest 128-multiple tile that evenly divides HW (keeps lane-dense,
    # aligned tiles); fall back to the full extent (always a legal block).
    for t in (2048, 1024, 512, 256, 128):
        if hw % t == 0:
            return t
    return hw


def full_conv_bn(x_nchw, gamma, beta, conv_w, conv_b):
    """x_nchw: (N, Cin, H, W); conv_w: (Cout, Cin, 1, 1); returns (N, Cout, H, W)."""
    N, Cin, H, W = x_nchw.shape
    Cout = conv_w.shape[0]
    HW = H * W
    P = N * HW

    # NCHW is contiguous with W innermost -> (N, Cin, HW) is a free reshape.
    x3 = x_nchw.reshape(N, Cin, HW).astype(jnp.float32)

    THW = _pick_spatial_tile(HW)
    grid = (N, HW // THW)

    # ---------------- Pass 1: batch statistics ----------------
    sums, sumsq = pl.pallas_call(
        bn_stats_kernel,
        out_shape=(
            jax.ShapeDtypeStruct((Cin, 1), jnp.float32),
            jax.ShapeDtypeStruct((Cin, 1), jnp.float32),
        ),
        grid=grid,
        in_specs=[pl.BlockSpec((1, Cin, THW), lambda n, j: (n, 0, j))],
        out_specs=(
            pl.BlockSpec((Cin, 1), lambda n, j: (0, 0)),
            pl.BlockSpec((Cin, 1), lambda n, j: (0, 0)),
        ),
        compiler_params=pltpu.CompilerParams(
            dimension_semantics=("arbitrary", "arbitrary")
        ),
    )(x3)

    mean = sums[:, 0] / P                                   # (Cin,)
    var = sumsq[:, 0] / P - mean * mean                     # biased variance
    scale = gamma.astype(jnp.float32) * jax.lax.rsqrt(var + BN_EPS)

    # ---------------- Fold BN into the 1x1 conv (tiny, done in JAX) ----------
    w2d = conv_w.reshape(Cout, Cin).astype(jnp.float32)     # (Cout, Cin)
    w_fold = w2d * scale[None, :]                           # (Cout, Cin)
    b_fold = w2d @ (beta.astype(jnp.float32) - scale * mean) + conv_b.astype(
        jnp.float32
    )                                                       # (Cout,)

    # Pad Cout up to a sublane multiple for a clean layout (no-op when Cout%8==0).
    Cout_pad = max(8, ((Cout + 7) // 8) * 8)
    if Cout_pad != Cout:
        w_fold = jnp.pad(w_fold, ((0, Cout_pad - Cout), (0, 0)))
        b_fold = jnp.pad(b_fold, (0, Cout_pad - Cout))
    b_col = b_fold.reshape(Cout_pad, 1)

    # ---------------- Pass 2: streaming folded conv ----------------
    out3 = pl.pallas_call(
        folded_conv1x1_kernel,
        out_shape=jax.ShapeDtypeStruct((N, Cout_pad, HW), jnp.float32),
        grid=grid,
        in_specs=[
            pl.BlockSpec((1, Cin, THW), lambda n, j: (n, 0, j)),   # x tiles
            pl.BlockSpec((Cout_pad, Cin), lambda n, j: (0, 0)),    # W' resident
            pl.BlockSpec((Cout_pad, 1), lambda n, j: (0, 0)),      # b' resident
        ],
        out_specs=pl.BlockSpec((1, Cout_pad, THW), lambda n, j: (n, 0, j)),
        compiler_params=pltpu.CompilerParams(
            dimension_semantics=("parallel", "parallel")
        ),
    )(x3, w_fold, b_col)

    if Cout_pad != Cout:
        out3 = out3[:, :Cout, :]
    return out3.reshape(N, Cout, H, W)


def _reference(x_nchw, gamma, beta, conv_w, conv_b):
    # Pure-JAX reference of BatchNorm2d(train) + Conv2d(1x1), NCHW.
    mean = jnp.mean(x_nchw, axis=(0, 2, 3), keepdims=True)
    var = jnp.mean((x_nchw - mean) ** 2, axis=(0, 2, 3), keepdims=True)
    xn = (x_nchw - mean) / jnp.sqrt(var + BN_EPS)
    xn = xn * gamma.reshape(1, -1, 1, 1) + beta.reshape(1, -1, 1, 1)
    w = conv_w.reshape(conv_w.shape[0], conv_w.shape[1])
    out = jnp.einsum("nchw,oc->nohw", xn, w) + conv_b.reshape(1, -1, 1, 1)
    return out


if __name__ == "__main__":
    # Small synthetic config: batch=2, in_dims=4, spatial=16x16, last_channels=8
    N, Cin, H, W, Cout = 2, 4, 16, 16, 8

    key = jax.random.PRNGKey(0)
    kx, kg, kb, kw, kc = jax.random.split(key, 5)

    x = jax.random.normal(kx, (N, Cin, H, W), dtype=jnp.float32)
    gamma = jax.random.normal(kg, (Cin,), dtype=jnp.float32) * 0.1 + 1.0
    beta = jax.random.normal(kb, (Cin,), dtype=jnp.float32) * 0.1
    conv_w = jax.random.normal(kw, (Cout, Cin, 1, 1), dtype=jnp.float32) * 0.1
    conv_b = jax.random.normal(kc, (Cout,), dtype=jnp.float32) * 0.1

    out = full_conv_bn(x, gamma, beta, conv_w, conv_b)
    out = jax.block_until_ready(out)

    ref = jax.block_until_ready(_reference(x, gamma, beta, conv_w, conv_b))
    assert out.shape == (N, Cout, H, W)
    assert jnp.allclose(out, ref, atol=1e-4, rtol=1e-4)

    print("KERNEL_OK")
</pallas_src>

<mosaic_0001>
module attributes {stable_mosaic.version = 11 : i64} {
  func.func @bn_stats_kernel(%arg0: i32, %arg1: i32, %arg2: memref<1x4x256xf32, #tpu.memory_space<vmem>>, %arg3: memref<4x1xf32, #tpu.memory_space<vmem>>, %arg4: memref<4x1xf32, #tpu.memory_space<vmem>>) attributes {dimension_semantics = [#tpu.dimension_semantics<arbitrary>, #tpu.dimension_semantics<arbitrary>], iteration_bounds = array<i64: 2, 1>, scalar_prefetch = 0 : i64, scratch_operands = 0 : i64, tpu.core_type = #tpu.core_type<tc>, window_params = [{transform_indices = @transform_0, window_bounds = array<i64: 1, 4, 256>}, {pipeline_mode = #tpu.pipeline_mode<synchronous>, transform_indices = @transform_1, window_bounds = array<i64: 4, 1>}, {pipeline_mode = #tpu.pipeline_mode<synchronous>, transform_indices = @transform_2, window_bounds = array<i64: 4, 1>}]} {
    %c0_i32 = arith.constant 0 : i32
    %0 = arith.cmpi eq, %arg0, %c0_i32 : i32
    %c0_i32_0 = arith.constant 0 : i32
    %1 = arith.cmpi eq, %arg1, %c0_i32_0 : i32
    %2 = arith.andi %0, %1 : i1
    %3 = arith.extui %2 : i1 to i32
    %c0_i32_1 = arith.constant 0 : i32
    %4 = arith.cmpi ne, %3, %c0_i32_1 : i32
    scf.if %4 {
      %cst_13 = arith.constant 0.000000e+00 : f32
      %18 = vector.broadcast %cst_13 : f32 to vector<4x1xf32>
      %c0_14 = arith.constant 0 : index
      %c0_15 = arith.constant 0 : index
      %19 = vector.load %arg3[%c0_14, %c0_15] : memref<4x1xf32, #tpu.memory_space<vmem>>, vector<4x1xf32>
      tpu.vector_store %arg3[%c0_14, %c0_15], %18 {strides = array<i32>} : memref<4x1xf32, #tpu.memory_space<vmem>>, vector<4x1xf32>,
      %cst_16 = arith.constant 0.000000e+00 : f32
      %20 = vector.broadcast %cst_16 : f32 to vector<4x1xf32>
      %c0_17 = arith.constant 0 : index
      %c0_18 = arith.constant 0 : index
      %21 = vector.load %arg4[%c0_17, %c0_18] : memref<4x1xf32, #tpu.memory_space<vmem>>, vector<4x1xf32>
      tpu.vector_store %arg4[%c0_17, %c0_18], %20 {strides = array<i32>} : memref<4x1xf32, #tpu.memory_space<vmem>>, vector<4x1xf32>,
    } else {
    }
    %c0 = arith.constant 0 : index
    %c0_2 = arith.constant 0 : index
    %c0_3 = arith.constant 0 : index
    %5 = vector.load %arg2[%c0, %c0_2, %c0_3] : memref<1x4x256xf32, #tpu.memory_space<vmem>>, vector<1x4x256xf32>
    %6 = vector.shape_cast %5 : vector<1x4x256xf32> to vector<4x256xf32>
    %c0_4 = arith.constant 0 : index
    %c0_5 = arith.constant 0 : index
    %7 = vector.load %arg3[%c0_4, %c0_5] : memref<4x1xf32, #tpu.memory_space<vmem>>, vector<4x1xf32>
    %cst = arith.constant dense<0.000000e+00> : vector<4xf32>
    %8 = vector.multi_reduction <add>, %6, %cst [1] : vector<4x256xf32> to vector<4xf32>
    %9 = vector.shape_cast %8 : vector<4xf32> to vector<4x1xf32>
    %10 = arith.addf %7, %9 : vector<4x1xf32>
    %c0_6 = arith.constant 0 : index
    %c0_7 = arith.constant 0 : index
    %11 = vector.load %arg3[%c0_6, %c0_7] : memref<4x1xf32, #tpu.memory_space<vmem>>, vector<4x1xf32>
    tpu.vector_store %arg3[%c0_6, %c0_7], %10 {strides = array<i32>} : memref<4x1xf32, #tpu.memory_space<vmem>>, vector<4x1xf32>,
    %c0_8 = arith.constant 0 : index
    %c0_9 = arith.constant 0 : index
    %12 = vector.load %arg4[%c0_8, %c0_9] : memref<4x1xf32, #tpu.memory_space<vmem>>, vector<4x1xf32>
    %13 = arith.mulf %6, %6 : vector<4x256xf32>
    %cst_10 = arith.constant dense<0.000000e+00> : vector<4xf32>
    %14 = vector.multi_reduction <add>, %13, %cst_10 [1] : vector<4x256xf32> to vector<4xf32>
    %15 = vector.shape_cast %14 : vector<4xf32> to vector<4x1xf32>
    %16 = arith.addf %12, %15 : vector<4x1xf32>
    %c0_11 = arith.constant 0 : index
    %c0_12 = arith.constant 0 : index
    %17 = vector.load %arg4[%c0_11, %c0_12] : memref<4x1xf32, #tpu.memory_space<vmem>>, vector<4x1xf32>
    tpu.vector_store %arg4[%c0_11, %c0_12], %16 {strides = array<i32>} : memref<4x1xf32, #tpu.memory_space<vmem>>, vector<4x1xf32>,
    return
  }
  func.func @transform_0(%arg0: i32, %arg1: i32) -> (i32, i32, i32) {
    %c0_i32 = arith.constant 0 : i32
    %c0_i32_0 = arith.constant 0 : i32
    return %arg0, %c0_i32, %arg1 : i32, i32, i32
  }
  func.func @transform_1(%arg0: i32, %arg1: i32) -> (i32, i32) {
    %c0_i32 = arith.constant 0 : i32
    %c0_i32_0 = arith.constant 0 : i32
    %c0_i32_1 = arith.constant 0 : i32
    return %c0_i32, %c0_i32_0 : i32, i32
  }
  func.func @transform_2(%arg0: i32, %arg1: i32) -> (i32, i32) {
    %c0_i32 = arith.constant 0 : i32
    %c0_i32_0 = arith.constant 0 : i32
    %c0_i32_1 = arith.constant 0 : i32
    return %c0_i32, %c0_i32_0 : i32, i32
  }
}

</mosaic_0001>

<llo_original>
// kernel: tpu_custom_call.1
$region0: #{tpu_custom_call.1}
  #allocation0 [shape = 'u32[]', space=smem, size = 0x4, offset = 0x4, fixed_abs, tag = 'smem constant byte address 0x4 - core index']
  #allocation1 [shape = 'u32[72,128]{1,0:T(1,128)}', space=vmem, size = 0x9000, scoped, tag = 'internal scratch']
  %s0 = inlined_call_operand.hbm [shape: f32[2,4,256], index: 0, kind: input, shape index: {}]
  %s1 = inlined_call_operand.vmem [shape: f32[4,1], index: 1, kind: output, shape index: {0}]
  %s2 = inlined_call_operand.vmem [shape: f32[4,1], index: 2, kind: output, shape index: {1}]
  %3 = xla_tuple %s1, %s2
  %s4 = sld [smem:[#allocation0]]
  $region53: #{tpu_custom_call.1} parent=0
    _
  %s6 = ssub.s32 1, %s4
  %s7 = scalar_select 0, %s6, %s4
  $region1: #{tpu_custom_call.1} parent=0
    #allocation2 [shape = 'u8[8192]{0}', space=vmem, size = 0x2000, scoped, tag = 'input window, operand 0']
    #allocation3 [shape = 's32[2]{0}', space=sflag, size = 0x8, scoped, tag = 'scoped memory for tpu_custom_call.1']
    %8 = vsyncpa [#allocation3], 0
    %s9 = scalar_lea.sflag [#allocation3], 1
    %10 = vsyncpa %s9, 0
    loop: start=0, step=1, limit=4
    $region2: #{tpu_custom_call.1} parent=1 // loop_pre_header
      _
    $region3: #{tpu_custom_call.1} parent=1 // loop_header
      %s12 = sphi 0, %s16
      %p13 = scmp.ge.s32.totalorder %s12, 4
      %s19 = sphi 0, %s31
      %s20 = sphi 0, %s27
      %s21 = sphi 0, %s19
      %s22 = sphi 0, %s20
      %s23 = sphi 0, %s21
      %s24 = sphi 0, %s22
      %s36 = sphi 0, %s38
      %s39 = sphi 0, %s36
      %s40 = sphi 0, %s39
      %s56 = sphi 0, %s40
      %s60 = sphi 0, %s60
      %s62 = sphi 0, %s60
      %s63 = sphi 0, %s62
      %s77 = sphi 0, %s63
      %s81 = sphi 0, %s81
      %s83 = sphi 0, %s81
      %s84 = sphi 0, %s83
      %s98 = sphi 0, %s84
    $region4: #{tpu_custom_call.1} parent=1 // loop_header_branch
      %15 = sbr.rel (%p13) target = $region8
    $region5: #{tpu_custom_call.1} parent=1 // loop_body
      %s17 = ssub.s32 %s12, 1
      %s18 = ssub.s32 %s12, 2
      %s25 = sadd.s32 1, %s20
      %p26 = scmp.ge.s32.totalorder %s25, 1
      %s27 = scalar_select %p26, 0, %s25
      %s28 = sadd.s32 1, %s19
      %s29 = scalar_select %p26, %s28, %s19
      %p30 = scmp.ge.s32.totalorder %s29, 2
      %s31 = scalar_select %p30, 0, %s29
      %s32 = ssub.s32 %s19, %s31
      %s33 = ssub.s32 %s20, %s27
      %s34 = sor.u32 %s32, %s33
      %p35 = scmp.eq.s32.totalorder %s34, 0
      %s37 = sadd.s32 %s36, 1
      %s38 = scalar_select %p35, %s36, %s37
      %p41 = pneg %p35
      %p42 = scmp.eq.s32.totalorder %s12, 1
      %p43 = por %p41, %p42
      %p44 = scmp.ne.s32.totalorder %s36, %s39
      %p45 = scmp.eq.s32.totalorder %s12, 0
      %p46 = por %p44, %p45
      %p47 = scmp.ne.s32.totalorder %s36, %s39
      %p48 = scmp.eq.s32.totalorder %s17, 1
      %p49 = por %p47, %p48
      %p50 = scmp.ne.s32.totalorder %s39, %s40
      %p51 = scmp.eq.s32.totalorder %s17, 0
      %p52 = por %p50, %p51
      %p53 = scmp.ne.s32.totalorder %s39, %s40
      %p54 = scmp.eq.s32.totalorder %s18, 1
      %p55 = por %p53, %p54
      %p57 = scmp.ne.s32.totalorder %s40, %s56
      %p58 = scmp.eq.s32.totalorder %s18, 0
      %p59 = por %p57, %p58
      %s61 = sadd.s32 %s60, 1
      %p64 = scmp.eq.s32.totalorder %s12, 1
      %p65 = scmp.ne.s32.totalorder %s60, %s62
      %p66 = scmp.eq.s32.totalorder %s12, 0
      %p67 = por %p65, %p66
      %p68 = scmp.ne.s32.totalorder %s60, %s62
      %p69 = scmp.eq.s32.totalorder %s17, 1
      %p70 = por %p68, %p69
      %p71 = scmp.ne.s32.totalorder %s62, %s63
      %p72 = scmp.eq.s32.totalorder %s17, 0
      %p73 = por %p71, %p72
      %p74 = scmp.ne.s32.totalorder %s62, %s63
      %p75 = scmp.eq.s32.totalorder %s18, 1
      %p76 = por %p74, %p75
      %p78 = scmp.ne.s32.totalorder %s63, %s77
      %p79 = scmp.eq.s32.totalorder %s18, 0
      %p80 = por %p78, %p79
      %s82 = sadd.s32 %s81, 1
      %p85 = scmp.eq.s32.totalorder %s12, 1
      %p86 = scmp.ne.s32.totalorder %s81, %s83
      %p87 = scmp.eq.s32.totalorder %s12, 0
      %p88 = por %p86, %p87
      %p89 = scmp.ne.s32.totalorder %s81, %s83
      %p90 = scmp.eq.s32.totalorder %s17, 1
      %p91 = por %p89, %p90
      %p92 = scmp.ne.s32.totalorder %s83, %s84
      %p93 = scmp.eq.s32.totalorder %s17, 0
      %p94 = por %p92, %p93
      %p95 = scmp.ne.s32.totalorder %s83, %s84
      %p96 = scmp.eq.s32.totalorder %s18, 1
      %p97 = por %p95, %p96
      %p99 = scmp.ne.s32.totalorder %s84, %s98
      %p100 = scmp.eq.s32.totalorder %s18, 0
      %p101 = por %p99, %p100
      %p102 = scmp.le.s32.totalorder 1, %s12
      %p103 = scmp.lt.s32.totalorder %s12, 3
      %p104 = pnand %p102, %p103
      %p105 = pneg %p104
      // Predicated region
      $region9: #{tpu_custom_call.1} parent=5 // pred_check
        _
      $region10: #{tpu_custom_call.1} parent=5 // pred_check_branch
        %107 = sbr.rel (%p104) target = $region12
      $region11: #{tpu_custom_call.1} parent=5 // pred_region
        %s108 = ssub.s32 %s12, 1
      $region12: #{tpu_custom_call.1} parent=5 // pred_fallthru
        _
      %p109 = scmp.lt.s32.totalorder %s12, 2
      // Predicated region
      $region13: #{tpu_custom_call.1} parent=5 // pred_check
        %p110 = pneg %p109
      $region14: #{tpu_custom_call.1} parent=5 // pred_check_branch
        %112 = sbr.rel (%p110) target = $region16
      $region15: #{tpu_custom_call.1} parent=5 // pred_region
        // Predicated region
        $region17: #{tpu_custom_call.1} parent=15 // pred_check
          %p113 = pneg %p46
        $region18: #{tpu_custom_call.1} parent=15 // pred_check_branch
          %115 = sbr.rel (%p113) target = $region20
        $region19: #{tpu_custom_call.1} parent=15 // pred_region
          %s116 = sand.u32 %s36, 1
          %s117 = scalar_lea.sflag [#allocation3], %s116
          %s118 = sand.u32 %s36, 1
          %s119 = smul.addr %s118, 8
          %s120 = scalar_lea.vmem [#allocation2], %s119
          %s121 = smul.u32 2, %s20
          %123 = vsyncadd %s117, 0
          %s124 = smul.addr %s19, 2
          %s125 = sadd.s32 %s121, %s124
          %s126 = smul.addr %s125, 4
          %s127 = scalar_lea.hbm %s0, %s126
          %s129 = sshll.u32 %s127, 4
          %s130 = int_to_ptr.hbm [resolvable:$true] %s129
          %s131 = sshll.u32 %s120, 4
          %s132 = int_to_ptr.vmem [resolvable:$true] %s131
          %134 = dma.hbm_to_vmem [thread:$0]  %s130, 128, %s132, %s117
        $region20: #{tpu_custom_call.1} parent=15 // pred_fallthru
          _
      $region16: #{tpu_custom_call.1} parent=5 // pred_fallthru
        _
      %p135 = scmp.le.s32.totalorder 1, %s12
      %p136 = scmp.lt.s32.totalorder %s12, 3
      %p137 = pnand %p135, %p136
      %p138 = pneg %p137
      // Predicated region
      $region21: #{tpu_custom_call.1} parent=5 // pred_check
        _
      $region22: #{tpu_custom_call.1} parent=5 // pred_check_branch
        %140 = sbr.rel (%p137) target = $region24
      $region23: #{tpu_custom_call.1} parent=5 // pred_region
        %s141 = ssub.s32 %s12, 1
        %s142 = sand.u32 %s39, 1
        %s143 = scalar_lea.sflag [#allocation3], %s142
        %s144 = sand.u32 %s39, 1
        %s145 = smul.addr %s144, 8
        %s146 = scalar_lea.vmem [#allocation2], %s145
        // Predicated region
        $region25: #{tpu_custom_call.1} parent=23 // pred_check
          %p147 = pneg %p52
        $region26: #{tpu_custom_call.1} parent=23 // pred_check_branch
          %149 = sbr.rel (%p147) target = $region28
        $region27: #{tpu_custom_call.1} parent=23 // pred_region
          %151 = dma.done %s143, 128
        $region28: #{tpu_custom_call.1} parent=23 // pred_fallthru
          _
        %s152 = sand.u32 %s39, 1
        %s153 = scalar_lea.sflag [#allocation3], %s152
        %s154 = sand.u32 %s39, 1
        %s155 = smul.addr %s154, 8
        %s156 = scalar_lea.vmem [#allocation2], %s155
        %p157 = pneg %p52
        %p158 = pneg %p49
        %p159 = pneg %p73
        %p160 = pneg %p70
        %p161 = pneg %p94
        %p162 = pneg %p91
        %s163 = smul.u32 2, %s22
        %p164 = scmp.eq.s32.totalorder %s21, 0
        %p165 = scmp.eq.s32.totalorder %s22, 0
        %p166 = pnand %p164, %p165
        %p167 = pneg %p166
        // Predicated region
        $region29: #{tpu_custom_call.1} parent=23 // pred_check
          _
        $region30: #{tpu_custom_call.1} parent=23 // pred_check_branch
          %169 = sbr.rel (%p166) target = $region32
        $region31: #{tpu_custom_call.1} parent=23 // pred_region
          %vm170 = vcmask 3072
          %171 = vst.msk [vmem:[%s1] sm:$0xf] %vm170, 0.0
          %172 = vst.msk [vmem:[%s2] sm:$0xf] %vm170, 0.0
        $region32: #{tpu_custom_call.1} parent=23 // pred_fallthru
          _
        %v173 = vld [vmem:[%s146] sm:$0xff]
        %v174 = vld [vmem:[%s1] sm:$0xf]
        %176 = vst [vmem:[#allocation1] ss:$2 sm:$0xff] %v173
        %v177 = vld.sshfl [vmem:[#allocation1] sm:$0xff pattern:$0x75316420]
        %v178 = vld.sshfl [vmem:[#allocation1 + $0x8] sm:$0xff pattern:$0x75316420]
        %vm181 = vcmask 1043456
        %v182 = vsel %vm181, %v177, 0.0
        %v183 = vsel %vm181, %v178, 0.0
        %v184 = vadd.f32 %v182, %v183
        %185 = vadd.xlane.f32.xlu0 %v184
        %v186 = vpop.xlane.xlu0 %185
        %v187 = vadd.f32 %v174, %v186
        %vm188 = vcmask 3072
        %189 = vst.msk [vmem:[%s1] sm:$0xf] %vm188, %v187
        %v190 = vld [vmem:[%s2] sm:$0xf]
        %v191 = vmul.f32 %v173, %v173
        %193 = vst [vmem:[#allocation1] ss:$2 sm:$0xff] %v191
        %v194 = vld.sshfl [vmem:[#allocation1] sm:$0xff pattern:$0x75316420]
        %v195 = vld.sshfl [vmem:[#allocation1 + $0x8] sm:$0xff pattern:$0x75316420]
        %v198 = vsel %vm181, %v194, 0.0
        %v199 = vsel %vm181, %v195, 0.0
        %v200 = vadd.f32 %v198, %v199
        %201 = vadd.xlane.f32.xlu0 %v200
        %v202 = vpop.xlane.xlu0 %201
        %v203 = vadd.f32 %v190, %v202
        %204 = vst.msk [vmem:[%s2] sm:$0xf] %vm188, %v203
        // Predicated region
        $region33: #{tpu_custom_call.1} parent=23 // pred_check
          %p205 = pneg %p70
        $region34: #{tpu_custom_call.1} parent=23 // pred_check_branch
          %207 = sbr.rel (%p205) target = $region36
        $region35: #{tpu_custom_call.1} parent=23 // pred_region
          _
        $region36: #{tpu_custom_call.1} parent=23 // pred_fallthru
          _
        // Predicated region
        $region37: #{tpu_custom_call.1} parent=23 // pred_check
          %p208 = pneg %p91
        $region38: #{tpu_custom_call.1} parent=23 // pred_check_branch
          %210 = sbr.rel (%p208) target = $region40
        $region39: #{tpu_custom_call.1} parent=23 // pred_region
          _
        $region40: #{tpu_custom_call.1} parent=23 // pred_fallthru
          _
        // Predicated region
        $region41: #{tpu_custom_call.1} parent=23 // pred_check
          %p211 = pneg %p70
        $region42: #{tpu_custom_call.1} parent=23 // pred_check_branch
          %213 = sbr.rel (%p211) target = $region44
        $region43: #{tpu_custom_call.1} parent=23 // pred_region
          _
        $region44: #{tpu_custom_call.1} parent=23 // pred_fallthru
          _
        // Predicated region
        $region45: #{tpu_custom_call.1} parent=23 // pred_check
          %p214 = pneg %p91
        $region46: #{tpu_custom_call.1} parent=23 // pred_check_branch
          %216 = sbr.rel (%p214) target = $region48
        $region47: #{tpu_custom_call.1} parent=23 // pred_region
          _
        $region48: #{tpu_custom_call.1} parent=23 // pred_fallthru
          _
      $region24: #{tpu_custom_call.1} parent=5 // pred_fallthru
        _
      %p217 = scmp.le.s32.totalorder 2, %s12
      // Predicated region
      $region49: #{tpu_custom_call.1} parent=5 // pred_check
        %p218 = pneg %p217
      $region50: #{tpu_custom_call.1} parent=5 // pred_check_branch
        %220 = sbr.rel (%p218) target = $region52
      $region51: #{tpu_custom_call.1} parent=5 // pred_region
        %s221 = ssub.s32 %s12, 2
      $region52: #{tpu_custom_call.1} parent=5 // pred_fallthru
        _
    $region6: #{tpu_custom_call.1} parent=1 // loop_footer
      %s16 = sadd.s32 1, %s12
    $region7: #{tpu_custom_call.1} parent=1 // loop_footer_branch
      %11 = sbr.rel target = $region3
    $region8: #{tpu_custom_call.1} parent=1 // loop_exit
      _
    %222 = vsyncpa [#allocation3], 1
    %s223 = scalar_lea.sflag [#allocation3], 1
    %224 = vsyncpa %s223, 1

</llo_original>
